<compile_context>
chip_gen: v5e
topology: v5e:2x2
jax: 0.10.0
libtpu: 0.0.40
codegen_flags: <defaults>
</compile_context>

<pallas_src>
import functools

import jax
import jax.numpy as jnp
from jax.experimental import pallas as pl
from jax.experimental.pallas import tpu as pltpu


# ---------------------------------------------------------------------------
# Stage 1: masked sum over T-tiles -> conv(k) along E -> sigmoid  (per batch row)
# ---------------------------------------------------------------------------
def _squeeze_kernel(len_ref, x_ref, w_ref, s_ref, acc_ref, ypad_ref):
    """len_ref : SMEM (B,) int32    per-batch valid lengths (scalar prefetch)
       x_ref   : VMEM (1, E, T_TILE) input tile of batch row `bi`
       w_ref   : SMEM (K,) f32      conv weights
       s_ref   : VMEM (1, E, 1) f32 gate output (resident across the T-tile axis)
       acc_ref : VMEM (1, E, 128) f32 lane-dense partial-sum accumulator (scratch)
       ypad_ref: VMEM (1, E + 2*pad, 1) f32 zero-padded buffer for the k-tap conv
    """
    bi = pl.program_id(0)
    ti = pl.program_id(1)
    nt = pl.num_programs(1)
    tsz = x_ref.shape[-1]
    esz = s_ref.shape[1]
    k = w_ref.shape[0]
    pad = (k - 1) // 2
    lanes = acc_ref.shape[-1]
    t0 = ti * tsz
    len_b = len_ref[bi]

    @pl.when(ti == 0)
    def _init():
        acc_ref[...] = jnp.zeros_like(acc_ref)

    def _accumulate(xv):
        if tsz % lanes == 0:
            # Chunked VPU adds into the lane-dense accumulator (no per-tile XLU reduce).
            acc = acc_ref[...]
            for c in range(tsz // lanes):  # static, small
                acc = acc + xv[:, :, c * lanes:(c + 1) * lanes]
            acc_ref[...] = acc
        else:
            # Single-tile fallback (tsz == T, not a multiple of 128).
            acc_ref[:, :, 0:1] += jnp.sum(xv, axis=-1, keepdims=True)

    # Skip tiles that lie entirely past this batch element's valid length.
    @pl.when(t0 < len_b)
    def _body():
        x = x_ref[...].astype(jnp.float32)

        @pl.when(t0 + tsz <= len_b)          # fully valid tile: plain sum, no mask
        def _full():
            _accumulate(x)

        @pl.when(t0 + tsz > len_b)           # boundary tile: int32 iota time mask
        def _boundary():
            tt = t0 + jax.lax.broadcasted_iota(jnp.int32, (1, 1, tsz), 2)
            _accumulate(jnp.where(tt < len_b, x, 0.0))

    # Finalize once per batch row: mean -> k-tap conv along E -> sigmoid.
    @pl.when(ti == nt - 1)
    def _finalize():
        total = jnp.sum(acc_ref[...], axis=-1, keepdims=True)          # (1, E, 1)
        # NOTE: length == 0 guarded (PyTorch reference would produce NaN/Inf here).
        inv_len = 1.0 / jnp.maximum(len_b.astype(jnp.float32), 1.0)
        y = total * inv_len

        # Zero-padded copy of y along E; k shifted reads implement the Conv1d
        # (cross-correlation, zero padding); weights are SMEM scalars.
        ypad_ref[...] = jnp.zeros_like(ypad_ref)
        ypad_ref[:, pad:pad + esz, :] = y
        z = jnp.zeros((1, esz, 1), jnp.float32)
        for d in range(k):  # static, tiny (k = 5)
            z = z + w_ref[d] * ypad_ref[:, d:d + esz, :]
        s_ref[...] = jax.nn.sigmoid(z)


# ---------------------------------------------------------------------------
# Stage 2: gating pass — pure load * scale -> store over a (B*E, T) row view.
# ---------------------------------------------------------------------------
def _gate_kernel(x_ref, s_ref, o_ref):
    x = x_ref[...]                            # (rows_tile, T_TILE), x's dtype
    s = s_ref[...].astype(x.dtype)            # (rows_tile, 1) broadcast over lanes
    o_ref[...] = (x * s).astype(o_ref.dtype)


# ---------------------------------------------------------------------------
# Tile selection helpers
# ---------------------------------------------------------------------------
def _pick_squeeze_t_tile(e, t, itemsize, max_tile=2048, target_bytes=1 << 20):
    if t <= 512:
        return t
    cand = (target_bytes // max(1, e * itemsize)) // 128 * 128
    tile = int(max(128, min(max_tile, cand)))
    return t if tile >= t else tile


def _pick_gate_tiles(rows, t, itemsize, max_t_tile=2048, target_bytes=2 << 20):
    t_tile = t if t <= max_t_tile else max_t_tile          # multiple of 128 or full T
    r = max(1, target_bytes // max(1, t_tile * itemsize))
    if r >= rows or rows <= 8:
        rows_tile = rows
    else:
        rows_tile = min(rows, max(8, (r // 8) * 8))
    return rows_tile, t_tile


# ---------------------------------------------------------------------------
# Wrapper
# ---------------------------------------------------------------------------
def eca_forward(x, length, conv_w, *,
                sq_t_tile=None, gate_rows_tile=None, gate_t_tile=None):
    """x: (B, E, T) f32/bf16, length: (B,) int, conv_w: (K,) f32 (Conv1d weight squeezed)."""
    b, e, t = x.shape
    k = conv_w.shape[0]
    pad = (k - 1) // 2
    out_dtype = x.dtype
    itemsize = jnp.dtype(x.dtype).itemsize

    lens_i32 = jnp.clip(length.astype(jnp.int32), 0, t)     # masked mean assumes len <= T
    conv_w32 = conv_w.astype(jnp.float32)

    # ---- Stage 1: squeeze (masked mean over T) + conv + sigmoid -> s (B, E, 1) f32 ----
    if sq_t_tile is None:
        sq_t_tile = _pick_squeeze_t_tile(e, t, itemsize)
    sq_t_tile = min(int(sq_t_tile), t)
    nt = pl.cdiv(t, sq_t_tile)

    s = pl.pallas_call(
        _squeeze_kernel,
        out_shape=jax.ShapeDtypeStruct((b, e, 1), jnp.float32),
        grid_spec=pltpu.PrefetchScalarGridSpec(
            num_scalar_prefetch=1,                 # per-batch lengths -> SMEM
            grid=(b, nt),                          # batch parallel, T-tiles reduction
            in_specs=[
                pl.BlockSpec((1, e, sq_t_tile), lambda bi, ti, lens: (bi, 0, ti)),
                pl.BlockSpec(memory_space=pltpu.MemorySpace.SMEM),   # conv weights
            ],
            out_specs=pl.BlockSpec((1, e, 1), lambda bi, ti, lens: (bi, 0, 0)),
            scratch_shapes=[
                pltpu.VMEM((1, e, 128), jnp.float32),                # lane-dense acc
                pltpu.VMEM((1, e + 2 * pad, 1), jnp.float32),        # conv padding buf
            ],
        ),
        compiler_params=pltpu.CompilerParams(
            dimension_semantics=("parallel", "arbitrary"),
            vmem_limit_bytes=32 * 1024 * 1024,
        ),
        cost_estimate=pl.CostEstimate(
            flops=2 * b * e * t + 2 * b * e * k,
            transcendentals=b * e,
            bytes_accessed=b * e * t * itemsize + b * e * 4,
        ),
    )(lens_i32, x, conv_w32)

    # ---- Stage 2: out = x * s over a (B*E, T) row view, fully parallel streaming ----
    rows = b * e
    x2 = x.reshape(rows, t)          # free reshape (contiguous leading-dim merge)
    s2 = s.reshape(rows, 1)

    if gate_rows_tile is None or gate_t_tile is None:
        auto_rows, auto_t = _pick_gate_tiles(rows, t, itemsize)
        gate_rows_tile = auto_rows if gate_rows_tile is None else gate_rows_tile
        gate_t_tile = auto_t if gate_t_tile is None else gate_t_tile
    gate_rows_tile = min(int(gate_rows_tile), rows)
    gate_t_tile = min(int(gate_t_tile), t)

    out2 = pl.pallas_call(
        _gate_kernel,
        out_shape=jax.ShapeDtypeStruct((rows, t), out_dtype),
        grid=(pl.cdiv(rows, gate_rows_tile), pl.cdiv(t, gate_t_tile)),
        in_specs=[
            pl.BlockSpec((gate_rows_tile, gate_t_tile), lambda i, j: (i, j)),
            pl.BlockSpec((gate_rows_tile, 1), lambda i, j: (i, 0)),
        ],
        out_specs=pl.BlockSpec((gate_rows_tile, gate_t_tile), lambda i, j: (i, j)),
        compiler_params=pltpu.CompilerParams(
            dimension_semantics=("parallel", "parallel"),
            vmem_limit_bytes=32 * 1024 * 1024,
        ),
        cost_estimate=pl.CostEstimate(
            flops=b * e * t,
            transcendentals=0,
            bytes_accessed=2 * b * e * t * itemsize + b * e * 4,
        ),
    )(x2, s2)

    return out2.reshape(b, e, t)


# ---------------------------------------------------------------------------
# Pure-JAX reference mirroring the PyTorch forward.
# ---------------------------------------------------------------------------
def eca_reference(x, length, conv_w):
    b, e, t = x.shape
    k = conv_w.shape[0]
    pad = (k - 1) // 2
    t_idx = jnp.arange(t)[None, None, :]
    mask = t_idx < length[:, None, None]
    y = jnp.sum(jnp.where(mask, x, 0.0), axis=-1) / length[:, None].astype(x.dtype)  # (B, E)
    y_pad = jnp.pad(y, ((0, 0), (pad, pad)))
    z = jnp.zeros_like(y)
    for d in range(k):
        z = z + conv_w[d] * y_pad[:, d:d + e]
    s = jax.nn.sigmoid(z)
    return x * s[:, :, None]


if __name__ == "__main__":
    B, E, T = 2, 16, 1000     # T deliberately NOT a multiple of 128 -> ragged last tiles
    K_SIZE = 5

    key = jax.random.PRNGKey(0)
    kx, kw = jax.random.split(key)
    x = jax.random.normal(kx, (B, E, T), dtype=jnp.float32)
    length = jnp.array([T, 600], dtype=jnp.int32)   # one full, one ragged sequence

    # Deterministic Conv1d(1,1,5,bias=False) weight (PyTorch-style uniform bound 1/sqrt(k)).
    bound = 1.0 / (K_SIZE ** 0.5)
    conv_w = jax.random.uniform(kw, (K_SIZE,), minval=-bound, maxval=bound,
                                dtype=jnp.float32)

    ref = eca_reference(x, length, conv_w)

    # 1) Default (auto) tiling: single squeeze T-tile, one big streaming gate block.
    out = jax.block_until_ready(jax.jit(eca_forward)(x, length, conv_w))
    assert out.shape == (B, E, T)
    assert jnp.allclose(out, ref, atol=1e-5, rtol=1e-5), "mismatch vs reference (auto tiles)"

    # 2) Small explicit tiles: multi-tile reduction, boundary masking, tile skipping,
    #    ragged last T-tile in both passes (exercises the no-pad / no-slice paths).
    fwd_small = jax.jit(functools.partial(
        eca_forward, sq_t_tile=256, gate_rows_tile=8, gate_t_tile=256))
    out2 = jax.block_until_ready(fwd_small(x, length, conv_w))
    assert jnp.allclose(out2, ref, atol=1e-5, rtol=1e-5), "mismatch vs reference (small tiles)"

    print("KERNEL_OK")
</pallas_src>

<mosaic_0001>
module attributes {stable_mosaic.version = 11 : i64} {
  func.func @_gate_kernel(%arg0: i32, %arg1: i32, %arg2: memref<32x1000xf32, #tpu.memory_space<vmem>>, %arg3: memref<32x1xf32, #tpu.memory_space<vmem>>, %arg4: memref<32x1000xf32, #tpu.memory_space<vmem>>) attributes {dimension_semantics = [#tpu.dimension_semantics<parallel>, #tpu.dimension_semantics<parallel>], iteration_bounds = array<i64: 1, 1>, scalar_prefetch = 0 : i64, scratch_operands = 0 : i64, tpu.core_type = #tpu.core_type<tc>, window_params = [{transform_indices = @transform_0, window_bounds = array<i64: 32, 1000>}, {transform_indices = @transform_1, window_bounds = array<i64: 32, 1>}, {transform_indices = @transform_2, window_bounds = array<i64: 32, 1000>}]} {
    %c0 = arith.constant 0 : index
    %c0_0 = arith.constant 0 : index
    %0 = vector.load %arg2[%c0, %c0_0] : memref<32x1000xf32, #tpu.memory_space<vmem>>, vector<32x1000xf32>
    %c0_1 = arith.constant 0 : index
    %c0_2 = arith.constant 0 : index
    %1 = vector.load %arg3[%c0_1, %c0_2] : memref<32x1xf32, #tpu.memory_space<vmem>>, vector<32x1xf32>
    %2 = vector.broadcast %1 : vector<32x1xf32> to vector<32x1000xf32>
    %3 = arith.mulf %0, %2 : vector<32x1000xf32>
    %c0_3 = arith.constant 0 : index
    %c0_4 = arith.constant 0 : index
    %4 = vector.load %arg4[%c0_3, %c0_4] : memref<32x1000xf32, #tpu.memory_space<vmem>>, vector<32x1000xf32>
    tpu.vector_store %arg4[%c0_3, %c0_4], %3 {strides = array<i32>} : memref<32x1000xf32, #tpu.memory_space<vmem>>, vector<32x1000xf32>,
    return
  }
  func.func @transform_0(%arg0: i32, %arg1: i32) -> (i32, i32) {
    %c0_i32 = arith.constant 0 : i32
    return %arg0, %arg1 : i32, i32
  }
  func.func @transform_1(%arg0: i32, %arg1: i32) -> (i32, i32) {
    %c0_i32 = arith.constant 0 : i32
    %c0_i32_0 = arith.constant 0 : i32
    return %arg0, %c0_i32 : i32, i32
  }
  func.func @transform_2(%arg0: i32, %arg1: i32) -> (i32, i32) {
    %c0_i32 = arith.constant 0 : i32
    return %arg0, %arg1 : i32, i32
  }
}

module attributes {stable_mosaic.version = 11 : i64} {
  func.func @_squeeze_kernel(%arg0: i32, %arg1: i32, %arg2: memref<2xi32, #tpu.memory_space<smem>>, %arg3: memref<1x16x1000xf32, #tpu.memory_space<vmem>>, %arg4: memref<5xf32, #tpu.memory_space<smem>>, %arg5: memref<1x16x1xf32, #tpu.memory_space<vmem>>, %arg6: memref<1x16x128xf32, #tpu.memory_space<vmem>>, %arg7: memref<1x20x1xf32, #tpu.memory_space<vmem>>) attributes {dimension_semantics = [#tpu.dimension_semantics<parallel>, #tpu.dimension_semantics<arbitrary>], iteration_bounds = array<i64: 2, 1>, scalar_prefetch = 1 : i64, scratch_operands = 2 : i64, tpu.core_type = #tpu.core_type<tc>, window_params = [{transform_indices = @transform_0, window_bounds = array<i64: 1, 16, 1000>}, {transform_indices = @transform_1, window_bounds = array<i64: 5>}, {transform_indices = @transform_2, window_bounds = array<i64: 1, 16, 1>}]} {
    %c1000_i32 = arith.constant 1000 : i32
    %0 = arith.muli %arg1, %c1000_i32 : i32
    %1 = arith.index_cast %arg0 : i32 to index
    %2 = memref.load %arg2[%1] : memref<2xi32, #tpu.memory_space<smem>>
    %c0_i32 = arith.constant 0 : i32
    %3 = arith.cmpi eq, %arg1, %c0_i32 : i32
    %4 = arith.extui %3 : i1 to i32
    %c0_i32_0 = arith.constant 0 : i32
    %5 = arith.cmpi ne, %4, %c0_i32_0 : i32
    scf.if %5 {
      %cst = arith.constant 0.000000e+00 : f32
      %12 = vector.broadcast %cst : f32 to vector<1x16x128xf32>
      %c0 = arith.constant 0 : index
      %c0_4 = arith.constant 0 : index
      %c0_5 = arith.constant 0 : index
      %13 = vector.load %arg6[%c0, %c0_4, %c0_5] : memref<1x16x128xf32, #tpu.memory_space<vmem>>, vector<1x16x128xf32>
      tpu.vector_store %arg6[%c0, %c0_4, %c0_5], %12 {strides = array<i32>} : memref<1x16x128xf32, #tpu.memory_space<vmem>>, vector<1x16x128xf32>,
    } else {
    }
    %6 = arith.cmpi slt, %0, %2 : i32
    %7 = arith.extui %6 : i1 to i32
    %c0_i32_1 = arith.constant 0 : i32
    %8 = arith.cmpi ne, %7, %c0_i32_1 : i32
    scf.if %8 {
      %c0 = arith.constant 0 : index
      %c0_4 = arith.constant 0 : index
      %c0_5 = arith.constant 0 : index
      %12 = vector.load %arg3[%c0, %c0_4, %c0_5] : memref<1x16x1000xf32, #tpu.memory_space<vmem>>, vector<1x16x1000xf32>
      %c1000_i32_6 = arith.constant 1000 : i32
      %13 = arith.addi %0, %c1000_i32_6 : i32
      %14 = arith.cmpi sle, %13, %2 : i32
      %15 = arith.extui %14 : i1 to i32
      %c0_i32_7 = arith.constant 0 : i32
      %16 = arith.cmpi ne, %15, %c0_i32_7 : i32
      scf.if %16 {
        %c0_10 = arith.constant 0 : index
        %c0_11 = arith.constant 0 : index
        %c0_12 = arith.constant 0 : index
        %21 = vector.load %arg6[%c0_10, %c0_11, %c0_12] : memref<1x16x128xf32, #tpu.memory_space<vmem>>, vector<1x16x1xf32>
        %cst = arith.constant dense<0.000000e+00> : vector<1x16xf32>
        %22 = vector.multi_reduction <add>, %12, %cst [2] : vector<1x16x1000xf32> to vector<1x16xf32>
        %23 = vector.shape_cast %22 : vector<1x16xf32> to vector<1x16x1xf32>
        %24 = arith.addf %21, %23 : vector<1x16x1xf32>
        %c0_13 = arith.constant 0 : index
        %c0_14 = arith.constant 0 : index
        %c0_15 = arith.constant 0 : index
        %25 = vector.load %arg6[%c0_13, %c0_14, %c0_15] : memref<1x16x128xf32, #tpu.memory_space<vmem>>, vector<1x16x1xf32>
        tpu.vector_store %arg6[%c0_13, %c0_14, %c0_15], %24 {strides = array<i32>} : memref<1x16x128xf32, #tpu.memory_space<vmem>>, vector<1x16x1xf32>,
      } else {
      }
      %c1000_i32_8 = arith.constant 1000 : i32
      %17 = arith.addi %0, %c1000_i32_8 : i32
      %18 = arith.cmpi sgt, %17, %2 : i32
      %19 = arith.extui %18 : i1 to i32
      %c0_i32_9 = arith.constant 0 : i32
      %20 = arith.cmpi ne, %19, %c0_i32_9 : i32
      scf.if %20 {
        %21 = tpu.iota {dimensions = array<i32: 2>} : vector<1x1x1000xi32>
        %22 = vector.broadcast %0 : i32 to vector<1x1x1000xi32>
        %23 = arith.addi %22, %21 : vector<1x1x1000xi32>
        %24 = vector.broadcast %2 : i32 to vector<1x1x1000xi32>
        %25 = arith.cmpi slt, %23, %24 : vector<1x1x1000xi32>
        %cst = arith.constant 0.000000e+00 : f32
        %26 = vector.shape_cast %25 : vector<1x1x1000xi1> to vector<1x1x1000xi1>
        %27 = vector.broadcast %26 : vector<1x1x1000xi1> to vector<1x16x1000xi1>
        %28 = vector.broadcast %cst : f32 to vector<1x16x1000xf32>
        %29 = arith.select %27, %12, %28 : vector<1x16x1000xi1>, vector<1x16x1000xf32>
        %c0_10 = arith.constant 0 : index
        %c0_11 = arith.constant 0 : index
        %c0_12 = arith.constant 0 : index
        %30 = vector.load %arg6[%c0_10, %c0_11, %c0_12] : memref<1x16x128xf32, #tpu.memory_space<vmem>>, vector<1x16x1xf32>
        %cst_13 = arith.constant dense<0.000000e+00> : vector<1x16xf32>
        %31 = vector.multi_reduction <add>, %29, %cst_13 [2] : vector<1x16x1000xf32> to vector<1x16xf32>
        %32 = vector.shape_cast %31 : vector<1x16xf32> to vector<1x16x1xf32>
        %33 = arith.addf %30, %32 : vector<1x16x1xf32>
        %c0_14 = arith.constant 0 : index
        %c0_15 = arith.constant 0 : index
        %c0_16 = arith.constant 0 : index
        %34 = vector.load %arg6[%c0_14, %c0_15, %c0_16] : memref<1x16x128xf32, #tpu.memory_space<vmem>>, vector<1x16x1xf32>
        tpu.vector_store %arg6[%c0_14, %c0_15, %c0_16], %33 {strides = array<i32>} : memref<1x16x128xf32, #tpu.memory_space<vmem>>, vector<1x16x1xf32>,
      } else {
      }
    } else {
    }
    %c0_i32_2 = arith.constant 0 : i32
    %9 = arith.cmpi eq, %arg1, %c0_i32_2 : i32
    %10 = arith.extui %9 : i1 to i32
    %c0_i32_3 = arith.constant 0 : i32
    %11 = arith.cmpi ne, %10, %c0_i32_3 : i32
    scf.if %11 {
      %c0 = arith.constant 0 : index
      %c0_4 = arith.constant 0 : index
      %c0_5 = arith.constant 0 : index
      %12 = vector.load %arg6[%c0, %c0_4, %c0_5] : memref<1x16x128xf32, #tpu.memory_space<vmem>>, vector<1x16x128xf32>
      %cst = arith.constant dense<0.000000e+00> : vector<1x16xf32>
      %13 = vector.multi_reduction <add>, %12, %cst [2] : vector<1x16x128xf32> to vector<1x16xf32>
      %14 = vector.shape_cast %13 : vector<1x16xf32> to vector<1x16x1xf32>
      %15 = arith.sitofp %2 : i32 to f32
      %cst_6 = arith.constant 1.000000e+00 : f32
      %16 = arith.maximumf %15, %cst_6 : f32
      %cst_7 = arith.constant 1.000000e+00 : f32
      %17 = arith.divf %cst_7, %16 : f32
      %18 = vector.broadcast %17 : f32 to vector<1x16x1xf32>
      %19 = arith.mulf %14, %18 : vector<1x16x1xf32>
      %cst_8 = arith.constant 0.000000e+00 : f32
      %20 = vector.broadcast %cst_8 : f32 to vector<1x20x1xf32>
      %c0_9 = arith.constant 0 : index
      %c0_10 = arith.constant 0 : index
      %c0_11 = arith.constant 0 : index
      %21 = vector.load %arg7[%c0_9, %c0_10, %c0_11] : memref<1x20x1xf32, #tpu.memory_space<vmem>>, vector<1x20x1xf32>
      tpu.vector_store %arg7[%c0_9, %c0_10, %c0_11], %20 {strides = array<i32>} : memref<1x20x1xf32, #tpu.memory_space<vmem>>, vector<1x20x1xf32>,
      %c0_12 = arith.constant 0 : index
      %c2 = arith.constant 2 : index
      %c0_13 = arith.constant 0 : index
      %22 = vector.load %arg7[%c0_12, %c2, %c0_13] : memref<1x20x1xf32, #tpu.memory_space<vmem>>, vector<1x16x1xf32>
      tpu.vector_store %arg7[%c0_12, %c2, %c0_13], %19 {strides = array<i32>} : memref<1x20x1xf32, #tpu.memory_space<vmem>>, vector<1x16x1xf32>,
      %cst_14 = arith.constant 0.000000e+00 : f32
      %23 = vector.broadcast %cst_14 : f32 to vector<1x16x1xf32>
      %c0_15 = arith.constant 0 : index
      %24 = memref.load %arg4[%c0_15] : memref<5xf32, #tpu.memory_space<smem>>
      %c0_16 = arith.constant 0 : index
      %c0_17 = arith.constant 0 : index
      %c0_18 = arith.constant 0 : index
      %25 = vector.load %arg7[%c0_16, %c0_17, %c0_18] : memref<1x20x1xf32, #tpu.memory_space<vmem>>, vector<1x16x1xf32>
      %26 = vector.broadcast %24 : f32 to vector<1x16x1xf32>
      %27 = arith.mulf %26, %25 : vector<1x16x1xf32>
      %28 = arith.addf %23, %27 : vector<1x16x1xf32>
      %c1 = arith.constant 1 : index
      %29 = memref.load %arg4[%c1] : memref<5xf32, #tpu.memory_space<smem>>
      %c0_19 = arith.constant 0 : index
      %c1_20 = arith.constant 1 : index
      %c0_21 = arith.constant 0 : index
      %30 = vector.load %arg7[%c0_19, %c1_20, %c0_21] : memref<1x20x1xf32, #tpu.memory_space<vmem>>, vector<1x16x1xf32>
      %31 = vector.broadcast %29 : f32 to vector<1x16x1xf32>
      %32 = arith.mulf %31, %30 : vector<1x16x1xf32>
      %33 = arith.addf %28, %32 : vector<1x16x1xf32>
      %c2_22 = arith.constant 2 : index
      %34 = memref.load %arg4[%c2_22] : memref<5xf32, #tpu.memory_space<smem>>
      %c0_23 = arith.constant 0 : index
      %c2_24 = arith.constant 2 : index
      %c0_25 = arith.constant 0 : index
      %35 = vector.load %arg7[%c0_23, %c2_24, %c0_25] : memref<1x20x1xf32, #tpu.memory_space<vmem>>, vector<1x16x1xf32>
      %36 = vector.broadcast %34 : f32 to vector<1x16x1xf32>
      %37 = arith.mulf %36, %35 : vector<1x16x1xf32>
      %38 = arith.addf %33, %37 : vector<1x16x1xf32>
      %c3 = arith.constant 3 : index
      %39 = memref.load %arg4[%c3] : memref<5xf32, #tpu.memory_space<smem>>
      %c0_26 = arith.constant 0 : index
      %c3_27 = arith.constant 3 : index
      %c0_28 = arith.constant 0 : index
      %40 = vector.load %arg7[%c0_26, %c3_27, %c0_28] : memref<1x20x1xf32, #tpu.memory_space<vmem>>, vector<1x16x1xf32>
      %41 = vector.broadcast %39 : f32 to vector<1x16x1xf32>
      %42 = arith.mulf %41, %40 : vector<1x16x1xf32>
      %43 = arith.addf %38, %42 : vector<1x16x1xf32>
      %c4 = arith.constant 4 : index
      %44 = memref.load %arg4[%c4] : memref<5xf32, #tpu.memory_space<smem>>
      %c0_29 = arith.constant 0 : index
      %c4_30 = arith.constant 4 : index
      %c0_31 = arith.constant 0 : index
      %45 = vector.load %arg7[%c0_29, %c4_30, %c0_31] : memref<1x20x1xf32, #tpu.memory_space<vmem>>, vector<1x16x1xf32>
      %46 = vector.broadcast %44 : f32 to vector<1x16x1xf32>
      %47 = arith.mulf %46, %45 : vector<1x16x1xf32>
      %48 = arith.addf %43, %47 : vector<1x16x1xf32>
      %49 = arith.negf %48 : vector<1x16x1xf32>
      %50 = math.exp %49 : vector<1x16x1xf32>
      %cst_32 = arith.constant 1.000000e+00 : f32
      %51 = vector.broadcast %cst_32 : f32 to vector<1x16x1xf32>
      %52 = arith.addf %51, %50 : vector<1x16x1xf32>
      %53 = arith.divf %51, %52 : vector<1x16x1xf32>
      %c0_33 = arith.constant 0 : index
      %c0_34 = arith.constant 0 : index
      %c0_35 = arith.constant 0 : index
      %54 = vector.load %arg5[%c0_33, %c0_34, %c0_35] : memref<1x16x1xf32, #tpu.memory_space<vmem>>, vector<1x16x1xf32>
      tpu.vector_store %arg5[%c0_33, %c0_34, %c0_35], %53 {strides = array<i32>} : memref<1x16x1xf32, #tpu.memory_space<vmem>>, vector<1x16x1xf32>,
    } else {
    }
    return
  }
  func.func @transform_0(%arg0: i32, %arg1: i32, %arg2: memref<2xi32, #tpu.memory_space<smem>>) -> (i32, i32, i32) {
    %c0_i32 = arith.constant 0 : i32
    %c0_i32_0 = arith.constant 0 : i32
    return %arg0, %c0_i32, %arg1 : i32, i32, i32
  }
  func.func @transform_1(%arg0: i32, %arg1: i32, %arg2: memref<2xi32, #tpu.memory_space<smem>>) -> i32 {
    %c0_i32 = arith.constant 0 : i32
    %c0_i32_0 = arith.constant 0 : i32
    return %c0_i32 : i32
  }
  func.func @transform_2(%arg0: i32, %arg1: i32, %arg2: memref<2xi32, #tpu.memory_space<smem>>) -> (i32, i32, i32) {
    %c0_i32 = arith.constant 0 : i32
    %c0_i32_0 = arith.constant 0 : i32
    %c0_i32_1 = arith.constant 0 : i32
    return %arg0, %c0_i32, %c0_i32_0 : i32, i32, i32
  }
}

</mosaic_0001>

<llo_original>
// kernel: eca_forward.3
$region0: #{eca_forward.3}
  #allocation0 [shape = 'u32[]', space=smem, size = 0x4, offset = 0x4, fixed_abs, tag = 'smem constant byte address 0x4 - core index']
  #allocation1 [shape = 'u32[72,128]{1,0:T(1,128)}', space=vmem, size = 0x9000, scoped, tag = 'internal scratch']
  %s0 = inlined_call_operand.vmem [shape: f32[32,1000], index: 0, kind: input, shape index: {}]
  %s1 = inlined_call_operand.vmem [shape: f32[32,1], index: 1, kind: input, shape index: {}]
  %s2 = inlined_call_operand.hbm [shape: f32[32,1000], index: 2, kind: output, shape index: {}]
  %s3 = sld [smem:[#allocation0]]
  $region18: #{eca_forward.3} parent=0
    _
  %s5 = ssub.s32 1, %s3
  %s6 = scalar_select 0, %s5, %s3
  $region1: #{eca_forward.3} parent=0
    #allocation2 [shape = 'u8[131072]{0}', space=vmem, size = 0x20000, scoped, tag = 'output window, operand 0, single buffered']
    #allocation3 [shape = 's32[1]{0}', space=sflag, size = 0x4, scoped, tag = 'scoped memory for eca_forward.3']
    %7 = vsyncpa [#allocation3], 0
    // Predicated region
    $region2: #{eca_forward.3} parent=1 // pred_check
      _
    $region3: #{eca_forward.3} parent=1 // pred_check_branch
      %9 = sbr.rel (0) target = $region5
    $region4: #{eca_forward.3} parent=1 // pred_region
      _
    $region5: #{eca_forward.3} parent=1 // pred_fallthru
      _
    // Predicated region
    $region6: #{eca_forward.3} parent=1 // pred_check
      _
    $region7: #{eca_forward.3} parent=1 // pred_check_branch
      %11 = sbr.rel (0) target = $region9
    $region8: #{eca_forward.3} parent=1 // pred_region
      _
    $region9: #{eca_forward.3} parent=1 // pred_fallthru
      _
    %v12 = vld [vmem:[%s0] sm:$0xff]
    %v13 = vld [vmem:[%s0 + $0x8] sm:$0xff]
    %v14 = vld [vmem:[%s0 + $0x10] sm:$0xff]
    %v15 = vld [vmem:[%s0 + $0x18] sm:$0xff]
    %v16 = vld [vmem:[%s0 + $0x20] sm:$0xff]
    %v17 = vld [vmem:[%s0 + $0x28] sm:$0xff]
    %v18 = vld [vmem:[%s0 + $0x30] sm:$0xff]
    %v19 = vld [vmem:[%s0 + $0x38] sm:$0xff]
    %v20 = vld [vmem:[%s0 + $0x40] sm:$0xff]
    %v21 = vld [vmem:[%s0 + $0x48] sm:$0xff]
    %v22 = vld [vmem:[%s0 + $0x50] sm:$0xff]
    %v23 = vld [vmem:[%s0 + $0x58] sm:$0xff]
    %v24 = vld [vmem:[%s0 + $0x60] sm:$0xff]
    %v25 = vld [vmem:[%s0 + $0x68] sm:$0xff]
    %v26 = vld [vmem:[%s0 + $0x70] sm:$0xff]
    %v27 = vld [vmem:[%s0 + $0x78] sm:$0xff]
    %v28 = vld [vmem:[%s0 + $0x80] sm:$0xff]
    %v29 = vld [vmem:[%s0 + $0x88] sm:$0xff]
    %v30 = vld [vmem:[%s0 + $0x90] sm:$0xff]
    %v31 = vld [vmem:[%s0 + $0x98] sm:$0xff]
    %v32 = vld [vmem:[%s0 + $0xa0] sm:$0xff]
    %v33 = vld [vmem:[%s0 + $0xa8] sm:$0xff]
    %v34 = vld [vmem:[%s0 + $0xb0] sm:$0xff]
    %v35 = vld [vmem:[%s0 + $0xb8] sm:$0xff]
    %v36 = vld [vmem:[%s0 + $0xc0] sm:$0xff]
    %v37 = vld [vmem:[%s0 + $0xc8] sm:$0xff]
    %v38 = vld [vmem:[%s0 + $0xd0] sm:$0xff]
    %v39 = vld [vmem:[%s0 + $0xd8] sm:$0xff]
    %v40 = vld [vmem:[%s0 + $0xe0] sm:$0xff]
    %v41 = vld [vmem:[%s0 + $0xe8] sm:$0xff]
    %v42 = vld [vmem:[%s0 + $0xf0] sm:$0xff]
    %v43 = vld [vmem:[%s0 + $0xf8] sm:$0xff]
    %v44 = vld [vmem:[%s1] sm:$0xff]
    %v45 = vld [vmem:[%s1 + $0x8] sm:$0xff]
    %v46 = vld [vmem:[%s1 + $0x10] sm:$0xff]
    %v47 = vld [vmem:[%s1 + $0x18] sm:$0xff]
    %49 = vset.pattern.permute.xlu0 0
    %50 = vperm.xlu0 %49, %v44
    %v51 = vpop.permute.xlu0 %50
    %54 = vset.pattern.permute.xlu0 0
    %55 = vperm.xlu0 %54, %v45
    %v56 = vpop.permute.xlu0 %55
    %59 = vset.pattern.permute.xlu0 0
    %60 = vperm.xlu0 %59, %v46
    %v61 = vpop.permute.xlu0 %60
    %64 = vset.pattern.permute.xlu0 0
    %65 = vperm.xlu0 %64, %v47
    %v66 = vpop.permute.xlu0 %65
    %v68 = vmul.f32 %v12, %v51
    %v69 = vmul.f32 %v13, %v51
    %v70 = vmul.f32 %v14, %v51
    %v71 = vmul.f32 %v15, %v51
    %v72 = vmul.f32 %v16, %v51
    %v73 = vmul.f32 %v17, %v51
    %v74 = vmul.f32 %v18, %v51
    %v75 = vmul.f32 %v19, %v51
    %v76 = vmul.f32 %v20, %v56
    %v77 = vmul.f32 %v21, %v56
    %v78 = vmul.f32 %v22, %v56
    %v79 = vmul.f32 %v23, %v56
    %v80 = vmul.f32 %v24, %v56
    %v81 = vmul.f32 %v25, %v56
    %v82 = vmul.f32 %v26, %v56
    %v83 = vmul.f32 %v27, %v56
    %v84 = vmul.f32 %v28, %v61
    %v85 = vmul.f32 %v29, %v61
    %v86 = vmul.f32 %v30, %v61
    %v87 = vmul.f32 %v31, %v61
    %v88 = vmul.f32 %v32, %v61
    %v89 = vmul.f32 %v33, %v61
    %v90 = vmul.f32 %v34, %v61
    %v91 = vmul.f32 %v35, %v61
    %v92 = vmul.f32 %v36, %v66
    %v93 = vmul.f32 %v37, %v66
    %v94 = vmul.f32 %v38, %v66
    %v95 = vmul.f32 %v39, %v66
    %v96 = vmul.f32 %v40, %v66
    %v97 = vmul.f32 %v41, %v66
    %v98 = vmul.f32 %v42, %v66
    %v99 = vmul.f32 %v43, %v66
    %100 = vst [vmem:[#allocation2] sm:$0xff] %v68
    %101 = vst [vmem:[#allocation2 + $0x8] sm:$0xff] %v69
    %102 = vst [vmem:[#allocation2 + $0x10] sm:$0xff] %v70
    %103 = vst [vmem:[#allocation2 + $0x18] sm:$0xff] %v71
    %104 = vst [vmem:[#allocation2 + $0x20] sm:$0xff] %v72
    %105 = vst [vmem:[#allocation2 + $0x28] sm:$0xff] %v73
    %106 = vst [vmem:[#allocation2 + $0x30] sm:$0xff] %v74
    %vm107 = vcmask 850944
    %108 = vst.msk [vmem:[#allocation2 + $0x38] sm:$0xff] %vm107, %v75
    %109 = vst [vmem:[#allocation2 + $0x40] sm:$0xff] %v76
    %110 = vst [vmem:[#allocation2 + $0x48] sm:$0xff] %v77
    %111 = vst [vmem:[#allocation2 + $0x50] sm:$0xff] %v78
    %112 = vst [vmem:[#allocation2 + $0x58] sm:$0xff] %v79
    %113 = vst [vmem:[#allocation2 + $0x60] sm:$0xff] %v80
    %114 = vst [vmem:[#allocation2 + $0x68] sm:$0xff] %v81
    %115 = vst [vmem:[#allocation2 + $0x70] sm:$0xff] %v82
    %116 = vst.msk [vmem:[#allocation2 + $0x78] sm:$0xff] %vm107, %v83
    %117 = vst [vmem:[#allocation2 + $0x80] sm:$0xff] %v84
    %118 = vst [vmem:[#allocation2 + $0x88] sm:$0xff] %v85
    %119 = vst [vmem:[#allocation2 + $0x90] sm:$0xff] %v86
    %120 = vst [vmem:[#allocation2 + $0x98] sm:$0xff] %v87
    %121 = vst [vmem:[#allocation2 + $0xa0] sm:$0xff] %v88
    %122 = vst [vmem:[#allocation2 + $0xa8] sm:$0xff] %v89
    %123 = vst [vmem:[#allocation2 + $0xb0] sm:$0xff] %v90
    %124 = vst.msk [vmem:[#allocation2 + $0xb8] sm:$0xff] %vm107, %v91
    %125 = vst [vmem:[#allocation2 + $0xc0] sm:$0xff] %v92
    %126 = vst [vmem:[#allocation2 + $0xc8] sm:$0xff] %v93
    %127 = vst [vmem:[#allocation2 + $0xd0] sm:$0xff] %v94
    %128 = vst [vmem:[#allocation2 + $0xd8] sm:$0xff] %v95
    %129 = vst [vmem:[#allocation2 + $0xe0] sm:$0xff] %v96
    %130 = vst [vmem:[#allocation2 + $0xe8] sm:$0xff] %v97
    %131 = vst [vmem:[#allocation2 + $0xf0] sm:$0xff] %v98
    %132 = vst.msk [vmem:[#allocation2 + $0xf8] sm:$0xff] %vm107, %v99
    // Predicated region
    $region10: #{eca_forward.3} parent=1 // pred_check
      _
    $region11: #{eca_forward.3} parent=1 // pred_check_branch
      %134 = sbr.rel (0) target = $region13
    $region12: #{eca_forward.3} parent=1 // pred_region
      %136 = vsyncadd [#allocation3], 0
      %s137 = sshll.u32 [#allocation2], 4
      %s138 = int_to_ptr.vmem [resolvable:$true] %s137
      %s139 = sshll.u32 %s2, 4
      %s140 = int_to_ptr.hbm [resolvable:$true] %s139
      %145 = dma.vmem_to_hbm [thread:$0]  %s138, 4096, %s140, [#allocation3], 1024, 1024, 64
    $region13: #{eca_forward.3} parent=1 // pred_fallthru
      _
    // Predicated region
    $region14: #{eca_forward.3} parent=1 // pred_check
      _
    $region15: #{eca_forward.3} parent=1 // pred_check_branch
      %147 = sbr.rel (0) target = $region17
    $region16: #{eca_forward.3} parent=1 // pred_region
      %149 = dma.done [#allocation3], 4096
    $region17: #{eca_forward.3} parent=1 // pred_fallthru
      _
    %150 = vsyncpa [#allocation3], 1

// kernel: eca_forward.2
$region0: #{eca_forward.2}
  #allocation0 [shape = 'u32[]', space=smem, size = 0x4, offset = 0x4, fixed_abs, tag = 'smem constant byte address 0x4 - core index']
  #allocation1 [shape = 'u32[72,128]{1,0:T(1,128)}', space=vmem, size = 0x9000, scoped, tag = 'internal scratch']
  #allocation2 [shape = 'f32[1,16,128]{2,1,0:T(8,128)}', space=vmem, size = 0x2000, scoped, tag = 'scratch operand']
  #allocation3 [shape = 'f32[1,20,1]{2,1,0:T(8,128)}', space=vmem, size = 0x3000, scoped, tag = 'scratch operand']
  #allocation4 [shape = 's32[1]{0}', space=sflag, size = 0x4, scoped, tag = 'scoped memory for eca_forward.2']
  #allocation5 [shape = 'u8[512]{0}', space=smem, size = 0x200, scoped, tag = 'prefetched SMEM operand 0']
  %s0 = inlined_call_operand.vmem [shape: s32[2], index: 0, kind: input, shape index: {}]
  %s1 = inlined_call_operand.hbm [shape: f32[2,16,1000], index: 1, kind: input, shape index: {}]
  %s2 = inlined_call_operand.hbm [shape: f32[5], index: 2, kind: input, shape index: {}]
  %s3 = inlined_call_operand.vmem [shape: f32[2,16,1], index: 3, kind: output, shape index: {}]
  %s4 = sld [smem:[#allocation0]]
  $region69: #{eca_forward.2} parent=0
    _
  %s6 = ssub.s32 1, %s4
  %s7 = scalar_select 0, %s6, %s4
  %s9 = sshll.u32 %s0, 4
  %s10 = int_to_ptr.vmem [resolvable:$true] %s9
  %12 = dma.vmem_to_smem %s10, 16, [#allocation5], [#allocation4]
  %14 = dma.done [#allocation4], 16
  %15 = sfence
  $region1: #{eca_forward.2} parent=0
    #allocation6 [shape = 'u8[131072]{0}', space=vmem, size = 0x20000, scoped, tag = 'input window, operand 1']
    #allocation7 [shape = 's32[2]{0}', space=sflag, size = 0x8, scoped, tag = 'scoped memory for eca_forward.2']
    #allocation8 [shape = 's32[2]{0}', space=sflag, size = 0x8, scoped, tag = 'scoped memory for eca_forward.2']
    #allocation9 [shape = 'u8[512]{0}', space=smem, size = 0x200, scoped, tag = 'input window, operand 2, single buffered']
    %16 = vsyncpa [#allocation7], 0
    %s17 = scalar_lea.sflag [#allocation7], 1
    %18 = vsyncpa %s17, 0
    %19 = vsyncpa [#allocation8], 0
    loop: start=0, step=1, limit=4
    $region2: #{eca_forward.2} parent=1 // loop_pre_header
      _
    $region3: #{eca_forward.2} parent=1 // loop_header
      %s21 = sphi 0, %s25
      %p22 = scmp.ge.s32.totalorder %s21, 4
      %s28 = sphi 0, %s40
      %s29 = sphi 0, %s36
      %s30 = sphi 0, %s28
      %s31 = sphi 0, %s29
      %s32 = sphi 0, %s30
      %s33 = sphi 0, %s31
      %s45 = sphi 0, %s47
      %s48 = sphi 0, %s45
      %s49 = sphi 0, %s48
      %s65 = sphi 0, %s49
      %s69 = sphi 0, %s69
      %s71 = sphi 0, %s69
      %s72 = sphi 0, %s71
      %s86 = sphi 0, %s72
      %s92 = sphi 0, %s94
      %s95 = sphi 0, %s92
      %s96 = sphi 0, %s95
      %s112 = sphi 0, %s96
    $region4: #{eca_forward.2} parent=1 // loop_header_branch
      %24 = sbr.rel (%p22) target = $region8
    $region5: #{eca_forward.2} parent=1 // loop_body
      %s26 = ssub.s32 %s21, 1
      %s27 = ssub.s32 %s21, 2
      %s34 = sadd.s32 1, %s29
      %p35 = scmp.ge.s32.totalorder %s34, 1
      %s36 = scalar_select %p35, 0, %s34
      %s37 = sadd.s32 1, %s28
      %s38 = scalar_select %p35, %s37, %s28
      %p39 = scmp.ge.s32.totalorder %s38, 2
      %s40 = scalar_select %p39, 0, %s38
      %s41 = ssub.s32 %s28, %s40
      %s42 = ssub.s32 %s29, %s36
      %s43 = sor.u32 %s41, %s42
      %p44 = scmp.eq.s32.totalorder %s43, 0
      %s46 = sadd.s32 %s45, 1
      %s47 = scalar_select %p44, %s45, %s46
      %p50 = pneg %p44
      %p51 = scmp.eq.s32.totalorder %s21, 1
      %p52 = por %p50, %p51
      %p53 = scmp.ne.s32.totalorder %s45, %s48
      %p54 = scmp.eq.s32.totalorder %s21, 0
      %p55 = por %p53, %p54
      %p56 = scmp.ne.s32.totalorder %s45, %s48
      %p57 = scmp.eq.s32.totalorder %s26, 1
      %p58 = por %p56, %p57
      %p59 = scmp.ne.s32.totalorder %s48, %s49
      %p60 = scmp.eq.s32.totalorder %s26, 0
      %p61 = por %p59, %p60
      %p62 = scmp.ne.s32.totalorder %s48, %s49
      %p63 = scmp.eq.s32.totalorder %s27, 1
      %p64 = por %p62, %p63
      %p66 = scmp.ne.s32.totalorder %s49, %s65
      %p67 = scmp.eq.s32.totalorder %s27, 0
      %p68 = por %p66, %p67
      %s70 = sadd.s32 %s69, 1
      %p73 = scmp.eq.s32.totalorder %s21, 1
      %p74 = scmp.ne.s32.totalorder %s69, %s71
      %p75 = scmp.eq.s32.totalorder %s21, 0
      %p76 = por %p74, %p75
      %p77 = scmp.ne.s32.totalorder %s69, %s71
      %p78 = scmp.eq.s32.totalorder %s26, 1
      %p79 = por %p77, %p78
      %p80 = scmp.ne.s32.totalorder %s71, %s72
      %p81 = scmp.eq.s32.totalorder %s26, 0
      %p82 = por %p80, %p81
      %p83 = scmp.ne.s32.totalorder %s71, %s72
      %p84 = scmp.eq.s32.totalorder %s27, 1
      %p85 = por %p83, %p84
      %p87 = scmp.ne.s32.totalorder %s72, %s86
      %p88 = scmp.eq.s32.totalorder %s27, 0
      %p89 = por %p87, %p88
      %s90 = ssub.s32 %s28, %s40
      %p91 = scmp.eq.s32.totalorder %s90, 0
      %s93 = sadd.s32 %s92, 1
      %s94 = scalar_select %p91, %s92, %s93
      %p97 = pneg %p91
      %p98 = scmp.eq.s32.totalorder %s21, 1
      %p99 = por %p97, %p98
      %p100 = scmp.ne.s32.totalorder %s92, %s95
      %p101 = scmp.eq.s32.totalorder %s21, 0
      %p102 = por %p100, %p101
      %p103 = scmp.ne.s32.totalorder %s92, %s95
      %p104 = scmp.eq.s32.totalorder %s26, 1
      %p105 = por %p103, %p104
      %p106 = scmp.ne.s32.totalorder %s95, %s96
      %p107 = scmp.eq.s32.totalorder %s26, 0
      %p108 = por %p106, %p107
      %p109 = scmp.ne.s32.totalorder %s95, %s96
      %p110 = scmp.eq.s32.totalorder %s27, 1
      %p111 = por %p109, %p110
      %p113 = scmp.ne.s32.totalorder %s96, %s112
      %p114 = scmp.eq.s32.totalorder %s27, 0
      %p115 = por %p113, %p114
      %p116 = scmp.le.s32.totalorder 1, %s21
      %p117 = scmp.lt.s32.totalorder %s21, 3
      %p118 = pnand %p116, %p117
      %p119 = pneg %p118
      // Predicated region
      $region9: #{eca_forward.2} parent=5 // pred_check
        _
      $region10: #{eca_forward.2} parent=5 // pred_check_branch
        %121 = sbr.rel (%p118) target = $region12
      $region11: #{eca_forward.2} parent=5 // pred_region
        %s122 = ssub.s32 %s21, 1
        // Predicated region
        $region13: #{eca_forward.2} parent=11 // pred_check
          %p123 = pneg %p82
        $region14: #{eca_forward.2} parent=11 // pred_check_branch
          %125 = sbr.rel (%p123) target = $region16
        $region15: #{eca_forward.2} parent=11 // pred_region
          %127 = vsyncadd [#allocation8], 0
          %s129 = sshll.u32 %s2, 4
          %s130 = int_to_ptr.hbm [resolvable:$true] %s129
          %132 = dma.hbm_to_smem %s130, 16, [#allocation9], [#allocation8]
        $region16: #{eca_forward.2} parent=11 // pred_fallthru
          _
      $region12: #{eca_forward.2} parent=5 // pred_fallthru
        _
      %p133 = scmp.lt.s32.totalorder %s21, 2
      // Predicated region
      $region17: #{eca_forward.2} parent=5 // pred_check
        %p134 = pneg %p133
      $region18: #{eca_forward.2} parent=5 // pred_check_branch
        %136 = sbr.rel (%p134) target = $region20
      $region19: #{eca_forward.2} parent=5 // pred_region
        // Predicated region
        $region21: #{eca_forward.2} parent=19 // pred_check
          %p137 = pneg %p55
        $region22: #{eca_forward.2} parent=19 // pred_check_branch
          %139 = sbr.rel (%p137) target = $region24
        $region23: #{eca_forward.2} parent=19 // pred_region
          %s140 = sand.u32 %s45, 1
          %s141 = scalar_lea.sflag [#allocation7], %s140
          %s142 = sand.u32 %s45, 1
          %s143 = smul.addr %s142, 128
          %s144 = scalar_lea.vmem [#allocation6], %s143
          %s145 = smul.u32 8, %s29
          %147 = vsyncadd %s141, 0
          %s148 = smul.addr %s28, 16
          %s149 = sadd.s32 %s145, %s148
          %s150 = smul.addr %s149, 8
          %s151 = scalar_lea.hbm %s1, %s150
          %s152 = sshll.u32 %s151, 4
          %s153 = int_to_ptr.hbm [resolvable:$true] %s152
          %s154 = sshll.u32 %s144, 4
          %s155 = int_to_ptr.vmem [resolvable:$true] %s154
          %160 = dma.hbm_to_vmem [thread:$0]  %s153, 2048, %s155, %s141, 1024, 1024, 64
        $region24: #{eca_forward.2} parent=19 // pred_fallthru
          _
      $region20: #{eca_forward.2} parent=5 // pred_fallthru
        _
      %p161 = scmp.le.s32.totalorder 1, %s21
      %p162 = scmp.lt.s32.totalorder %s21, 3
      %p163 = pnand %p161, %p162
      %p164 = pneg %p163
      // Predicated region
      $region25: #{eca_forward.2} parent=5 // pred_check
        _
      $region26: #{eca_forward.2} parent=5 // pred_check_branch
        %166 = sbr.rel (%p163) target = $region28
      $region27: #{eca_forward.2} parent=5 // pred_region
        %s167 = ssub.s32 %s21, 1
        %s168 = sand.u32 %s48, 1
        %s169 = scalar_lea.sflag [#allocation7], %s168
        %s170 = sand.u32 %s48, 1
        %s171 = smul.addr %s170, 128
        %s172 = scalar_lea.vmem [#allocation6], %s171
        // Predicated region
        $region29: #{eca_forward.2} parent=27 // pred_check
          %p173 = pneg %p61
        $region30: #{eca_forward.2} parent=27 // pred_check_branch
          %175 = sbr.rel (%p173) target = $region32
        $region31: #{eca_forward.2} parent=27 // pred_region
          %177 = dma.done %s169, 2048
        $region32: #{eca_forward.2} parent=27 // pred_fallthru
          _
        // Predicated region
        $region33: #{eca_forward.2} parent=27 // pred_check
          %p178 = pneg %p82
        $region34: #{eca_forward.2} parent=27 // pred_check_branch
          %180 = sbr.rel (%p178) target = $region36
        $region35: #{eca_forward.2} parent=27 // pred_region
          %182 = dma.done [#allocation8], 16
        $region36: #{eca_forward.2} parent=27 // pred_fallthru
          _
        %183 = sfence
        %s184 = sand.u32 %s48, 1
        %s185 = scalar_lea.sflag [#allocation7], %s184
        %s186 = sand.u32 %s48, 1
        %s187 = smul.addr %s186, 128
        %s188 = scalar_lea.vmem [#allocation6], %s187
        %p189 = pneg %p61
        %p190 = pneg %p58
        %p191 = pneg %p82
        %p192 = pneg %p79
        %p193 = pneg %p108
        %p194 = pneg %p105
        %p195 = scmp.lt.s32.totalorder %s30, 1
        %s196 = scalar_select %p195, %s30, 1
        %s197 = smul.addr %s196, 2
        %s198 = smul.addr %s197, 8
        %s199 = scalar_lea.vmem %s3, %s198
        %s200 = smul.u32 8, %s31
        %p201 = scmp.lt.s32.totalorder %s30, 1
        %s202 = scalar_select %p201, %s30, 1
        %s203 = smul.addr %s202, 2
        %s204 = smul.addr %s203, 8
        %s205 = scalar_lea.vmem %s3, %s204
        %s206 = smul.u32 %s31, 1000
        %s207 = sld [smem:[#allocation5 + %s30]]
        %p208 = scmp.eq.s32.totalorder %s31, 0
        // Predicated region
        $region37: #{eca_forward.2} parent=27 // pred_check
          %p209 = pneg %p208
        $region38: #{eca_forward.2} parent=27 // pred_check_branch
          %211 = sbr.rel (%p209) target = $region40
        $region39: #{eca_forward.2} parent=27 // pred_region
          %212 = vst [vmem:[#allocation2] sm:$0xff] 0.0
          %213 = vst [vmem:[#allocation2 + $0x8] sm:$0xff] 0.0
        $region40: #{eca_forward.2} parent=27 // pred_fallthru
          _
        %p214 = scmp.lt.s32.totalorder %s206, %s207
        // Predicated region
        $region41: #{eca_forward.2} parent=27 // pred_check
          %p215 = pneg %p214
        $region42: #{eca_forward.2} parent=27 // pred_check_branch
          %217 = sbr.rel (%p215) target = $region44
        $region43: #{eca_forward.2} parent=27 // pred_region
          %v218 = vld [vmem:[%s172] sm:$0xff]
          %v219 = vld [vmem:[%s172 + $0x8] sm:$0xff]
          %v220 = vld [vmem:[%s172 + $0x10] sm:$0xff]
          %v221 = vld [vmem:[%s172 + $0x18] sm:$0xff]
          %v222 = vld [vmem:[%s172 + $0x20] sm:$0xff]
          %v223 = vld [vmem:[%s172 + $0x28] sm:$0xff]
          %v224 = vld [vmem:[%s172 + $0x30] sm:$0xff]
          %v225 = vld [vmem:[%s172 + $0x38] sm:$0xff]
          %v226 = vld [vmem:[%s172 + $0x40] sm:$0xff]
          %v227 = vld [vmem:[%s172 + $0x48] sm:$0xff]
          %v228 = vld [vmem:[%s172 + $0x50] sm:$0xff]
          %v229 = vld [vmem:[%s172 + $0x58] sm:$0xff]
          %v230 = vld [vmem:[%s172 + $0x60] sm:$0xff]
          %v231 = vld [vmem:[%s172 + $0x68] sm:$0xff]
          %v232 = vld [vmem:[%s172 + $0x70] sm:$0xff]
          %v233 = vld [vmem:[%s172 + $0x78] sm:$0xff]
          %s234 = sadd.s32 %s206, 1000
          %p235 = scmp.le.s32.totalorder %s234, %s207
          // Predicated region
          $region45: #{eca_forward.2} parent=43 // pred_check
            %p236 = pneg %p235
          $region46: #{eca_forward.2} parent=43 // pred_check_branch
            %238 = sbr.rel (%p236) target = $region48
          $region47: #{eca_forward.2} parent=43 // pred_region
            %v239 = vld [vmem:[#allocation2] sm:$0xff]
            %v240 = vld [vmem:[#allocation2 + $0x8] sm:$0xff]
            %v241 = vadd.f32 %v218, %v219
            %v242 = vadd.f32 %v241, %v220
            %v243 = vadd.f32 %v242, %v221
            %v244 = vadd.f32 %v243, %v222
            %v245 = vadd.f32 %v244, %v223
            %v246 = vadd.f32 %v245, %v224
            %vm247 = vcmask 850944
            %v248 = vsel %vm247, %v225, 0.0
            %v249 = vadd.f32 %v246, %v248
            %250 = vadd.xlane.f32.xlu0 %v249
            %v251 = vpop.xlane.xlu0 %250
            %v252 = vadd.f32 %v226, %v227
            %v253 = vadd.f32 %v252, %v228
            %v254 = vadd.f32 %v253, %v229
            %v255 = vadd.f32 %v254, %v230
            %v256 = vadd.f32 %v255, %v231
            %v257 = vadd.f32 %v256, %v232
            %v258 = vsel %vm247, %v233, 0.0
            %v259 = vadd.f32 %v257, %v258
            %260 = vadd.xlane.f32.xlu0 %v259
            %v261 = vpop.xlane.xlu0 %260
            %v262 = vadd.f32 %v239, %v251
            %v263 = vadd.f32 %v240, %v261
            %vm264 = vcmask 7168
            %265 = vst.msk [vmem:[#allocation2] sm:$0xff] %vm264, %v262
            %266 = vst.msk [vmem:[#allocation2 + $0x8] sm:$0xff] %vm264, %v263
          $region48: #{eca_forward.2} parent=43 // pred_fallthru
            _
          %p267 = scmp.gt.s32.totalorder %s234, %s207
          // Predicated region
          $region49: #{eca_forward.2} parent=43 // pred_check
            %p268 = pneg %p267
          $region50: #{eca_forward.2} parent=43 // pred_check_branch
            %270 = sbr.rel (%p268) target = $region52
          $region51: #{eca_forward.2} parent=43 // pred_region
            %v271 = vlaneseq
            %v272 = vand.u32 %v271, 127
            %v273 = vadd.s32 %v272, 128
            %v274 = vadd.s32 %v272, 256
            %v275 = vadd.s32 %v272, 384
            %v276 = vadd.s32 %v272, 512
            %v277 = vadd.s32 %v272, 640
            %v278 = vadd.s32 %v272, 768
            %v279 = vadd.s32 %v272, 896
            %v280 = vstv %s206
            %v281 = vadd.s32 %v280, %v272
            %v282 = vadd.s32 %v280, %v273
            %v283 = vadd.s32 %v280, %v274
            %v284 = vadd.s32 %v280, %v275
            %v285 = vadd.s32 %v280, %v276
            %v286 = vadd.s32 %v280, %v277
            %v287 = vadd.s32 %v280, %v278
            %v288 = vadd.s32 %v280, %v279
            %v289 = vstv %s207
            %vm290 = vcmp.lt.s32.totalorder %v281, %v289
            %vm291 = vcmp.lt.s32.totalorder %v282, %v289
            %vm292 = vcmp.lt.s32.totalorder %v283, %v289
            %vm293 = vcmp.lt.s32.totalorder %v284, %v289
            %vm294 = vcmp.lt.s32.totalorder %v285, %v289
            %vm295 = vcmp.lt.s32.totalorder %v286, %v289
            %vm296 = vcmp.lt.s32.totalorder %v287, %v289
            %vm297 = vcmp.lt.s32.totalorder %v288, %v289
            %v298 = vsel %vm290, 1, 0
            %v299 = vsel %vm291, 1, 0
            %v300 = vsel %vm292, 1, 0
            %v301 = vsel %vm293, 1, 0
            %v302 = vsel %vm294, 1, 0
            %v303 = vsel %vm295, 1, 0
            %v304 = vsel %vm296, 1, 0
            %v305 = vsel %vm297, 1, 0
            %vm306 = vcmp.eq.s32.totalorder %v298, 1
            %vm307 = vcmp.eq.s32.totalorder %v299, 1
            %vm308 = vcmp.eq.s32.totalorder %v300, 1
            %vm309 = vcmp.eq.s32.totalorder %v301, 1
            %vm310 = vcmp.eq.s32.totalorder %v302, 1
            %vm311 = vcmp.eq.s32.totalorder %v303, 1
            %vm312 = vcmp.eq.s32.totalorder %v304, 1
            %vm313 = vcmp.eq.s32.totalorder %v305, 1
            %v314 = vsel %vm306, %v218, 0.0
            %v315 = vsel %vm307, %v219, 0.0
            %v316 = vsel %vm308, %v220, 0.0
            %v317 = vsel %vm309, %v221, 0.0
            %v318 = vsel %vm310, %v222, 0.0
            %v319 = vsel %vm311, %v223, 0.0
            %v320 = vsel %vm312, %v224, 0.0
            %v321 = vsel %vm313, %v225, 0.0
            %v322 = vsel %vm306, %v226, 0.0
            %v323 = vsel %vm307, %v227, 0.0
            %v324 = vsel %vm308, %v228, 0.0
            %v325 = vsel %vm309, %v229, 0.0
            %v326 = vsel %vm310, %v230, 0.0
            %v327 = vsel %vm311, %v231, 0.0
            %v328 = vsel %vm312, %v232, 0.0
            %v329 = vsel %vm313, %v233, 0.0
            %v330 = vld [vmem:[#allocation2] sm:$0xff]
            %v331 = vld [vmem:[#allocation2 + $0x8] sm:$0xff]
            %v332 = vadd.f32 %v314, %v315
            %v333 = vadd.f32 %v332, %v316
            %v334 = vadd.f32 %v333, %v317
            %v335 = vadd.f32 %v334, %v318
            %v336 = vadd.f32 %v335, %v319
            %v337 = vadd.f32 %v336, %v320
            %vm338 = vcmask 850944
            %v339 = vsel %vm338, %v321, 0.0
            %v340 = vadd.f32 %v337, %v339
            %341 = vadd.xlane.f32.xlu0 %v340
            %v342 = vpop.xlane.xlu0 %341
            %v343 = vadd.f32 %v322, %v323
            %v344 = vadd.f32 %v343, %v324
            %v345 = vadd.f32 %v344, %v325
            %v346 = vadd.f32 %v345, %v326
            %v347 = vadd.f32 %v346, %v327
            %v348 = vadd.f32 %v347, %v328
            %v349 = vsel %vm338, %v329, 0.0
            %v350 = vadd.f32 %v348, %v349
            %351 = vadd.xlane.f32.xlu0 %v350
            %v352 = vpop.xlane.xlu0 %351
            %v353 = vadd.f32 %v330, %v342
            %v354 = vadd.f32 %v331, %v352
            %vm355 = vcmask 7168
            %356 = vst.msk [vmem:[#allocation2] sm:$0xff] %vm355, %v353
            %357 = vst.msk [vmem:[#allocation2 + $0x8] sm:$0xff] %vm355, %v354
          $region52: #{eca_forward.2} parent=43 // pred_fallthru
            _
        $region44: #{eca_forward.2} parent=27 // pred_fallthru
          _
        // Predicated region
        $region53: #{eca_forward.2} parent=27 // pred_check
          %p358 = pneg %p208
        $region54: #{eca_forward.2} parent=27 // pred_check_branch
          %360 = sbr.rel (%p358) target = $region56
        $region55: #{eca_forward.2} parent=27 // pred_region
          %v361 = vld [vmem:[#allocation2] sm:$0xff]
          %v362 = vld [vmem:[#allocation2 + $0x8] sm:$0xff]
          %363 = vadd.xlane.f32.xlu0 %v361
          %v364 = vpop.xlane.xlu0 %363
          %365 = vadd.xlane.f32.xlu0 %v362
          %v366 = vpop.xlane.xlu0 %365
          %s367 = scvt.s32.f32 %s207
          %s368 = smax.f32 %s367, 1.0
          %v369 = vstv %s368
          %v370 = vrcp.pop %v369
          %v371 = vmul.f32 %v369, %v370
          %v372 = vsub.f32 1.0, %v371
          %v373 = vmul.f32 %v370, %v372
          %v374 = vadd.f32 %v370, %v373
          %vm375 = vweird.f32 %v369
          %vm376 = vweird.f32 %v370
          %vm377 = vmor %vm375, %vm376
          %v378 = vsel %vm377, %v370, %v374
          %v379 = vand.u32 2147483647, %v369
          %vm380 = vcmp.eq.f32.partialorder %v379, 8.507059e+37
          %v381 = vand.u32 %v369, 2147483648
          %v382 = vor.u32 1.1754944e-38, %v381
          %v383 = vsel %vm380, %v382, %v378
          %s384 = vtos %v383
          %v385 = vstv %s384
          %v386 = vmul.f32 %v364, %v385
          %v387 = vmul.f32 %v366, %v385
          %vm388 = vcmask 7168
          %389 = vst.msk [vmem:[#allocation3] sm:$0xff] %vm388, 0.0
          %390 = vst.msk [vmem:[#allocation3 + $0x8] sm:$0xff] %vm388, 0.0
          %vm391 = vcmask 3072
          %392 = vst.msk [vmem:[#allocation3 + $0x10] sm:$0xf] %vm391, 0.0
          %393 = vst.msk [vmem:[#allocation3 + $0x2] sm:$0xff] %vm388, %v386
          %394 = vst.msk [vmem:[#allocation3 + $0xa] sm:$0xff] %vm388, %v387
          %s395 = sld [smem:[#allocation9]]
          %v396 = vld [vmem:[#allocation3] sm:$0xff]
          %v397 = vld [vmem:[#allocation3 + $0x8] sm:$0xff]
          %v398 = vstv %s395
          %v399 = vmul.f32 %v398, %v396
          %v400 = vmul.f32 %v398, %v397
          %v401 = vadd.f32 %v399, 0.0
          %v402 = vadd.f32 %v400, 0.0
          %s403 = sld [smem:[#allocation9 + $0x1]]
          %v404 = vld [vmem:[#allocation3 + $0x1] sm:$0xff]
          %v405 = vld [vmem:[#allocation3 + $0x9] sm:$0xff]
          %v406 = vstv %s403
          %v407 = vmul.f32 %v406, %v404
          %v408 = vmul.f32 %v406, %v405
          %v409 = vadd.f32 %v401, %v407
          %v410 = vadd.f32 %v402, %v408
          %s411 = sld [smem:[#allocation9 + $0x2]]
          %v412 = vld [vmem:[#allocation3 + $0x2] sm:$0xff]
          %v413 = vld [vmem:[#allocation3 + $0xa] sm:$0xff]
          %v414 = vstv %s411
          %v415 = vmul.f32 %v414, %v412
          %v416 = vmul.f32 %v414, %v413
          %v417 = vadd.f32 %v409, %v415
          %v418 = vadd.f32 %v410, %v416
          %s419 = sld [smem:[#allocation9 + $0x3]]
          %v420 = vld [vmem:[#allocation3 + $0x3] sm:$0xff]
          %v421 = vld [vmem:[#allocation3 + $0xb] sm:$0xff]
          %v422 = vstv %s419
          %v423 = vmul.f32 %v422, %v420
          %v424 = vmul.f32 %v422, %v421
          %v425 = vadd.f32 %v417, %v423
          %v426 = vadd.f32 %v418, %v424
          %s427 = sld [smem:[#allocation9 + $0x4]]
          %v428 = vld [vmem:[#allocation3 + $0x4] sm:$0xff]
          %v429 = vld [vmem:[#allocation3 + $0xc] sm:$0xff]
          %v430 = vstv %s427
          %v431 = vmul.f32 %v430, %v428
          %v432 = vmul.f32 %v430, %v429
          %v433 = vadd.f32 %v425, %v431
          %v434 = vadd.f32 %v426, %v432
          %v435 = vxor.u32 %v433, 2147483648
          %v436 = vxor.u32 %v434, 2147483648
          %v437 = vmul.f32 %v435, 1.442695
          %v438 = vpow.pop %v437
          %v439 = vmul.f32 %v436, 1.442695
          %v440 = vpow.pop %v439
          %v441 = vadd.f32 %v438, 1.0
          %v442 = vadd.f32 %v440, 1.0
          %v443 = vrcp.pop %v441
          %v444 = vmul.f32 %v441, %v443
          %v445 = vsub.f32 1.0, %v444
          %v446 = vmul.f32 %v443, %v445
          %v447 = vadd.f32 %v443, %v446
          %vm448 = vweird.f32 %v441
          %vm449 = vweird.f32 %v443
          %vm450 = vmor %vm448, %vm449
          %v451 = vsel %vm450, %v443, %v447
          %v452 = vand.u32 2147483647, %v441
          %vm453 = vcmp.eq.f32.partialorder %v452, 8.507059e+37
          %v454 = vand.u32 %v441, 2147483648
          %v455 = vor.u32 1.1754944e-38, %v454
          %v456 = vsel %vm453, %v455, %v451
          %v457 = vmul.f32 1.0, %v456
          %v458 = vrcp.pop %v442
          %v459 = vmul.f32 %v442, %v458
          %v460 = vsub.f32 1.0, %v459
          %v461 = vmul.f32 %v458, %v460
          %v462 = vadd.f32 %v458, %v461
          %vm463 = vweird.f32 %v442
          %vm464 = vweird.f32 %v458
          %vm465 = vmor %vm463, %vm464
          %v466 = vsel %vm465, %v458, %v462
          %v467 = vand.u32 2147483647, %v442
          %vm468 = vcmp.eq.f32.partialorder %v467, 8.507059e+37
          %v469 = vand.u32 %v442, 2147483648
          %v470 = vor.u32 1.1754944e-38, %v469
          %v471 = vsel %vm468, %v470, %v466
          %v472 = vmul.f32 1.0, %v471
          %473 = vst.msk [vmem:[%s205] sm:$0xff] %vm388, %v457
          %474 = vst.msk [vmem:[%s205 + $0x8] sm:$0xff] %vm388, %v472
        $region56: #{eca_forward.2} parent=27 // pred_fallthru
          _
        %p475 = scmp.lt.s32.totalorder %s30, 1
        %s476 = scalar_select %p475, %s30, 1
        %s477 = smul.addr %s476, 2
        %s478 = smul.addr %s477, 8
        %s479 = scalar_lea.vmem %s3, %s478
        // Predicated region
        $region57: #{eca_forward.2} parent=27 // pred_check
          %p480 = pneg %p105
        $region58: #{eca_forward.2} parent=27 // pred_check_branch
          %482 = sbr.rel (%p480) target = $region60
        $region59: #{eca_forward.2} parent=27 // pred_region
          _
        $region60: #{eca_forward.2} parent=27 // pred_fallthru
          _
      $region28: #{eca_forward.2} parent=5 // pred_fallthru
        _
      %p483 = scmp.le.s32.totalorder 2, %s21
      // Predicated region
      $region61: #{eca_forward.2} parent=5 // pred_check
        %p484 = pneg %p483
      $region62: #{eca_forward.2} parent=5 // pred_check_branch
        %486 = sbr.rel (%p484) target = $region64
      $region63: #{eca_forward.2} parent=5 // pred_region
        %s487 = ssub.s32 %s21, 2
        // Predicated region
        $region65: #{eca_forward.2} parent=63 // pred_check
          %p488 = pneg %p111
        $region66: #{eca_forward.2} parent=63 // pred_check_branch
          %490 = sbr.rel (%p488) target = $region68
        $region67: #{eca_forward.2} parent=63 // pred_region
          %p491 = scmp.lt.s32.totalorder %s32, 1
          %s492 = scalar_select %p491, %s32, 1
          %s493 = smul.addr %s492, 2
          %s494 = smul.addr %s493, 8
          %s495 = scalar_lea.vmem %s3, %s494
        $region68: #{eca_forward.2} parent=63 // pred_fallthru
          _
      $region64: #{eca_forward.2} parent=5 // pred_fallthru
        _
    $region6: #{eca_forward.2} parent=1 // loop_footer
      %s25 = sadd.s32 1, %s21
    $region7: #{eca_forward.2} parent=1 // loop_footer_branch
      %20 = sbr.rel target = $region3
    $region8: #{eca_forward.2} parent=1 // loop_exit
      _
    %496 = vsyncpa [#allocation7], 1
    %s497 = scalar_lea.sflag [#allocation7], 1
    %498 = vsyncpa %s497, 1
    %499 = vsyncpa [#allocation8], 1
    %s500 = scalar_lea.sflag [#allocation8], 1
    %501 = vsyncpa %s500, 1

</llo_original>
